<compile_context>
chip_gen: v6e
topology: v6e:2x2x1
jax: 0.10.0
libtpu: 0.0.40
codegen_flags: <defaults>
</compile_context>

<pallas_src>
import math
from functools import partial

import jax
import jax.numpy as jnp
from jax import lax
from jax.experimental import pallas as pl
from jax.experimental.pallas import tpu as pltpu


# ------------------------------ small helpers ------------------------------- #

def _pick_tile(dim, candidates):
    """Largest candidate tile that evenly divides `dim`, else the full dim.

    The full-dim fallback always satisfies the (8,128) BlockSpec rule (block ==
    full array dim); very large non-divisible dims would then need a ragged-tail
    path, which these demo shapes never hit.
    """
    for c in candidates:
        if c <= dim and dim % c == 0:
            return c
    return dim


def _compiler_params(dimension_semantics):
    """CompilerParams with an explicit VMEM limit (~3/4 of physical capacity)."""
    kwargs = dict(dimension_semantics=dimension_semantics)
    try:
        cap = getattr(pltpu.get_tpu_info(), "vmem_capacity_bytes", None)
        if cap:
            kwargs["vmem_limit_bytes"] = int(cap) * 3 // 4  # 96MiB v5e/v6e, 48MiB v7x
    except Exception:
        pass  # fall back to the default scoped VMEM limit
    return pltpu.CompilerParams(**kwargs)


# ------------------------------ tiled linear -------------------------------- #

def _linear_kernel(x_ref, w_ref, b_ref, o_ref, acc_ref):
    # x tile: (tm, tk), w tile: (tk, tn)  (weight pre-transposed -> plain x @ w,
    # no in-kernel transpose / XLU contention with the MXU pushes).
    @pl.when(pl.program_id(2) == 0)
    def _():
        acc_ref[...] = jnp.zeros(acc_ref.shape, jnp.float32)

    acc_ref[...] += jnp.dot(x_ref[...], w_ref[...],
                            preferred_element_type=jnp.float32)

    @pl.when(pl.program_id(2) == pl.num_programs(2) - 1)
    def _():
        o_ref[...] = (acc_ref[...] + b_ref[...]).astype(o_ref.dtype)


def linear(x2d, w, b, *, out_dtype=None, tm=None, tn=None, tk=None):
    """y = x2d @ w + b, tiled and pipelined. w: (Din, Dout) pre-transposed."""
    M, Din = x2d.shape
    Din_w, Dout = w.shape
    assert Din == Din_w
    out_dtype = out_dtype if out_dtype is not None else x2d.dtype

    # 512-tiles are ~1 MiB f32 each: safe on all generations with the raised
    # VMEM limit; v5e/v6e have headroom for 1024 if the projection is HBM-bound.
    tm = tm or _pick_tile(M, (512, 256, 128, 64, 32, 16, 8))
    tn = tn or _pick_tile(Dout, (512, 256, 128))
    tk = tk or _pick_tile(Din, (512, 256, 128))

    b2d = b.reshape(1, Dout).astype(jnp.float32)
    grid = (M // tm, Dout // tn, Din // tk)

    return pl.pallas_call(
        _linear_kernel,
        out_shape=jax.ShapeDtypeStruct((M, Dout), out_dtype),
        grid=grid,
        in_specs=[
            pl.BlockSpec((tm, tk), lambda i, j, k: (i, k)),
            pl.BlockSpec((tk, tn), lambda i, j, k: (k, j)),
            pl.BlockSpec((1, tn), lambda i, j, k: (0, j)),
        ],
        out_specs=pl.BlockSpec((tm, tn), lambda i, j, k: (i, j)),
        scratch_shapes=[pltpu.VMEM((tm, tn), jnp.float32)],
        compiler_params=_compiler_params(("parallel", "parallel", "arbitrary")),
    )(x2d, w, b2d)


# --------------------- flash-style multi-head attention --------------------- #

def _flash_attn_kernel(q_ref, k_ref, v_ref, o_ref, m_ref, l_ref, acc_ref, *,
                       heads_per_group, head_dim, q_off, k_off, v_off,
                       compute_dtype, approx_recip):
    # q_ref: (1, tq,  blk_w)   k_ref/v_ref: (1, tkv, blk_w)
    # Split path: blk_w = group_w (only this head group's lanes), offsets 0.
    # Fallback path (tiny inner): blk_w = 3*inner, offsets (0, inner, 2*inner).
    kv_step = pl.program_id(3)

    @pl.when(kv_step == 0)
    def _():
        m_ref[...] = jnp.full(m_ref.shape, -jnp.inf, jnp.float32)
        l_ref[...] = jnp.zeros(l_ref.shape, jnp.float32)
        acc_ref[...] = jnp.zeros(acc_ref.shape, jnp.float32)

    q_blk = q_ref[0]    # (tq,  blk_w)
    k_blk = k_ref[0]    # (tkv, blk_w)
    v_blk = v_ref[0]    # (tkv, blk_w)

    # Small static unroll: at most 128/head_dim heads per group (typ. 1 or 2),
    # so only a couple of (tq, tkv) score tiles are live at a time.
    for h in range(heads_per_group):
        q_h = q_blk[:, q_off + h * head_dim:q_off + (h + 1) * head_dim]
        k_h = k_blk[:, k_off + h * head_dim:k_off + (h + 1) * head_dim]
        v_h = v_blk[:, v_off + h * head_dim:v_off + (h + 1) * head_dim]

        # scores (tq, tkv); 1/sqrt(head_dim) is already baked into w_q.
        s = lax.dot_general(
            q_h, k_h, dimension_numbers=(((1,), (1,)), ((), ())),
            preferred_element_type=jnp.float32)

        m_prev = m_ref[:, h:h + 1]                                    # (tq, 1)
        m_new = jnp.maximum(m_prev, jnp.max(s, axis=-1, keepdims=True))
        alpha = jnp.exp(m_prev - m_new)                               # (tq, 1)
        p = jnp.exp(s - m_new)                                        # f32 softmax math

        sl = slice(h * head_dim, (h + 1) * head_dim)
        # l is stored broadcast across this head's Dh columns so the finalize is
        # a single lane-dense multiply + store (no per-head concat / narrow vst).
        l_ref[:, sl] = alpha * l_ref[:, sl] + jnp.sum(p, axis=-1, keepdims=True)
        acc_ref[:, sl] = alpha * acc_ref[:, sl] + lax.dot_general(
            p.astype(compute_dtype), v_h,
            dimension_numbers=(((1,), (0,)), ((), ())),
            preferred_element_type=jnp.float32)
        m_ref[:, h:h + 1] = m_new

    @pl.when(kv_step == pl.num_programs(3) - 1)
    def _():
        inv_l = pl.reciprocal(l_ref[...], approx=approx_recip)
        o_ref[0] = (acc_ref[...] * inv_l).astype(o_ref.dtype)   # one lane-dense store


def attention(qkv, n_heads, head_dim, *, compute_dtype=jnp.float32,
              tq=None, tkv=None):
    """qkv: (B, S, 3*H*Dh) head-packed QKV -> (B, S, H*Dh) attention output."""
    B, S, three_inner = qkv.shape
    inner = n_heads * head_dim
    assert three_inner == 3 * inner

    # tkv=128 keeps a single f32 score tile at <=32 vregs even with 2 heads per
    # group; KV HBM re-reads scale with S/tq, so tq prefers 256.
    tq = tq or _pick_tile(S, (256, 128, 64, 32, 16, 8))
    tkv = tkv or _pick_tile(S, (128, 64, 32, 16, 8))
    approx_recip = compute_dtype != jnp.float32

    # ---- head grouping: lane-blocked Q/K/V streams (>=128-lane groups) ------ #
    def _choose_group_width():
        if head_dim >= 128 and head_dim % 128 == 0:
            return head_dim
        if head_dim < 128 and 128 % head_dim == 0 and inner % 128 == 0:
            return 128
        return None   # tiny / irregular models: fall back to one group

    group_w = _choose_group_width()
    split = group_w is not None
    if not split:
        group_w = inner
    n_groups = inner // group_w
    heads_per_group = group_w // head_dim

    if split:
        blk_w = group_w
        q_off = k_off = v_off = 0
        q_map = lambda b, g, qi, ki: (b, qi, g)
        k_map = lambda b, g, qi, ki: (b, ki, n_groups + g)
        v_map = lambda b, g, qi, ki: (b, ki, 2 * n_groups + g)
    else:
        blk_w = three_inner                      # full last dim -> (8,128)-legal
        q_off, k_off, v_off = 0, inner, 2 * inner
        q_map = lambda b, g, qi, ki: (b, qi, 0)
        k_map = lambda b, g, qi, ki: (b, ki, 0)
        v_map = lambda b, g, qi, ki: (b, ki, 0)

    kernel = partial(_flash_attn_kernel,
                     heads_per_group=heads_per_group, head_dim=head_dim,
                     q_off=q_off, k_off=k_off, v_off=v_off,
                     compute_dtype=compute_dtype, approx_recip=approx_recip)

    grid = (B, n_groups, S // tq, S // tkv)
    # TODO(synk): if profiling shows exposed DMA on the K/V streams, add
    # pipeline_mode=pl.Buffered(3) to the K/V BlockSpecs (cheap once blocks are
    # group_w-wide).
    return pl.pallas_call(
        kernel,
        out_shape=jax.ShapeDtypeStruct((B, S, inner), qkv.dtype),
        grid=grid,
        in_specs=[
            pl.BlockSpec((1, tq, blk_w), q_map),
            pl.BlockSpec((1, tkv, blk_w), k_map),
            pl.BlockSpec((1, tkv, blk_w), v_map),
        ],
        out_specs=pl.BlockSpec((1, tq, group_w), lambda b, g, qi, ki: (b, qi, g)),
        scratch_shapes=[
            pltpu.VMEM((tq, heads_per_group), jnp.float32),  # running max m (lane-packed)
            pltpu.VMEM((tq, group_w), jnp.float32),          # running sum l (per-head cols)
            pltpu.VMEM((tq, group_w), jnp.float32),          # running output accumulator
        ],
        compiler_params=_compiler_params(
            ("parallel", "parallel", "parallel", "arbitrary")),
    )(qkv, qkv, qkv)


# ------------------------------- MHA forward -------------------------------- #

def init_mha_params(key, d_model, n_heads, head_dim):
    """Deterministic init mirroring nn.Linear default (uniform +-1/sqrt(fan_in))."""
    inner = n_heads * head_dim
    ks = jax.random.split(key, 8)

    def lin(kw, kb, d_out, d_in):
        bound = 1.0 / math.sqrt(d_in)
        w = jax.random.uniform(kw, (d_out, d_in), jnp.float32, -bound, bound)
        b = jax.random.uniform(kb, (d_out,), jnp.float32, -bound, bound)
        return w, b

    return {
        "q_proj": lin(ks[0], ks[1], inner, d_model),
        "k_proj": lin(ks[2], ks[3], inner, d_model),
        "v_proj": lin(ks[4], ks[5], inner, d_model),
        "out_proj": lin(ks[6], ks[7], d_model, inner),
    }


def prepare_mha_params(params, head_dim, *, compute_dtype=jnp.float32):
    """One-time repack: fuse + pre-transpose QKV weights, bake in 1/sqrt(Dh)."""
    wq, bq = params["q_proj"]
    wk, bk = params["k_proj"]
    wv, bv = params["v_proj"]
    wo, bo = params["out_proj"]
    scale = 1.0 / math.sqrt(head_dim)

    w_qkv = jnp.concatenate([wq * scale, wk, wv], axis=0)   # (3*inner, D)
    b_qkv = jnp.concatenate([bq * scale, bk, bv], axis=0)   # (3*inner,)
    return {
        "w_qkv": jnp.asarray(w_qkv.T, compute_dtype),        # (D, 3*inner)
        "b_qkv": b_qkv.astype(jnp.float32),
        "w_out": jnp.asarray(wo.T, compute_dtype),           # (inner, D)
        "b_out": bo.astype(jnp.float32),
    }


def mha_forward(prepared, x, n_heads, head_dim, *, compute_dtype=jnp.float32):
    """x: (B, S, d_model) -> (B, S, d_model). Self-attention (k = v = q input).

    bf16 compute path is valid on v5e/v6e/v7x: MXU runs bf16 natively with f32
    accumulation; softmax statistics stay f32.
    """
    # TODO(synk): training-mode dropout, attn_bias and causal masking are not
    # implemented (eval-mode defaults of the PyTorch module).
    B, S, D = x.shape
    inner = n_heads * head_dim

    x2d = x.reshape(B * S, D).astype(compute_dtype)
    qkv = linear(x2d, prepared["w_qkv"], prepared["b_qkv"],
                 out_dtype=compute_dtype)                     # (B*S, 3*inner)
    qkv = qkv.reshape(B, S, 3 * inner)                        # head-packed

    o = attention(qkv, n_heads, head_dim, compute_dtype=compute_dtype)

    out = linear(o.reshape(B * S, inner), prepared["w_out"], prepared["b_out"],
                 out_dtype=jnp.float32)                       # (B*S, D)
    return out.reshape(B, S, D)


# --------------------------- reference (pure JAX) ---------------------------- #

def mha_reference(params, x, n_heads, head_dim):
    B, S, D = x.shape

    def lin(t, w, b):
        return t @ w.T + b

    q = lin(x, *params["q_proj"]).reshape(B, S, n_heads, head_dim).transpose(0, 2, 1, 3)
    k = lin(x, *params["k_proj"]).reshape(B, S, n_heads, head_dim).transpose(0, 2, 1, 3)
    v = lin(x, *params["v_proj"]).reshape(B, S, n_heads, head_dim).transpose(0, 2, 1, 3)
    s = jnp.einsum("bhqd,bhkd->bhqk", q, k) / math.sqrt(head_dim)
    p = jax.nn.softmax(s, axis=-1)
    o = jnp.einsum("bhqk,bhkd->bhqd", p, v)
    o = o.transpose(0, 2, 1, 3).reshape(B, S, n_heads * head_dim)
    return lin(o, *params["out_proj"])


# ----------------------------------- main ------------------------------------ #

if __name__ == "__main__":
    B, S, d_model = 2, 8, 32
    n_heads = 2
    head_dim = d_model // n_heads  # 16

    key = jax.random.PRNGKey(0)
    k_param, k_x = jax.random.split(key)
    params = init_mha_params(k_param, d_model, n_heads, head_dim)
    x = jax.random.normal(k_x, (B, S, d_model), jnp.float32)

    ref = mha_reference(params, x, n_heads, head_dim)

    # f32 path: tight correctness check against the pure-JAX reference.
    prep_f32 = prepare_mha_params(params, head_dim, compute_dtype=jnp.float32)
    out_f32 = jax.block_until_ready(
        mha_forward(prep_f32, x, n_heads, head_dim, compute_dtype=jnp.float32))
    assert out_f32.shape == (B, S, d_model)
    if not jnp.allclose(out_f32, ref, atol=1e-4, rtol=1e-4):
        raise AssertionError("f32 Pallas MHA output does not match reference")

    # bf16 fast path (all generations): f32 accumulation/softmax, looser tol.
    prep_bf16 = prepare_mha_params(params, head_dim, compute_dtype=jnp.bfloat16)
    out_bf16 = jax.block_until_ready(
        mha_forward(prep_bf16, x, n_heads, head_dim, compute_dtype=jnp.bfloat16))
    if not jnp.allclose(out_bf16, ref, atol=3e-2, rtol=3e-2):
        raise AssertionError("bf16 Pallas MHA output does not match reference")

    print("KERNEL_OK")
</pallas_src>

<mosaic_0001>
module attributes {stable_mosaic.version = 11 : i64} {
  func.func @_linear_kernel(%arg0: i32, %arg1: i32, %arg2: i32, %arg3: memref<16x32xf32, #tpu.memory_space<vmem>>, %arg4: memref<32x96xf32, #tpu.memory_space<vmem>>, %arg5: memref<1x96xf32, #tpu.memory_space<vmem>>, %arg6: memref<16x96xf32, #tpu.memory_space<vmem>>, %arg7: memref<16x96xf32, #tpu.memory_space<vmem>>) attributes {dimension_semantics = [#tpu.dimension_semantics<parallel>, #tpu.dimension_semantics<parallel>, #tpu.dimension_semantics<arbitrary>], iteration_bounds = array<i64: 1, 1, 1>, scalar_prefetch = 0 : i64, scratch_operands = 1 : i64, tpu.core_type = #tpu.core_type<tc>, window_params = [{transform_indices = @transform_0, window_bounds = array<i64: 16, 32>}, {transform_indices = @transform_1, window_bounds = array<i64: 32, 96>}, {transform_indices = @transform_2, window_bounds = array<i64: 1, 96>}, {transform_indices = @transform_3, window_bounds = array<i64: 16, 96>}]} {
    %c0_i32 = arith.constant 0 : i32
    %0 = arith.cmpi eq, %arg2, %c0_i32 : i32
    %1 = arith.extui %0 : i1 to i32
    %c0_i32_0 = arith.constant 0 : i32
    %2 = arith.cmpi ne, %1, %c0_i32_0 : i32
    scf.if %2 {
      %cst_10 = arith.constant 0.000000e+00 : f32
      %12 = vector.broadcast %cst_10 : f32 to vector<16x96xf32>
      %c0_11 = arith.constant 0 : index
      %c0_12 = arith.constant 0 : index
      %13 = vector.load %arg7[%c0_11, %c0_12] : memref<16x96xf32, #tpu.memory_space<vmem>>, vector<16x96xf32>
      tpu.vector_store %arg7[%c0_11, %c0_12], %12 {strides = array<i32>} : memref<16x96xf32, #tpu.memory_space<vmem>>, vector<16x96xf32>,
    } else {
    }
    %c0 = arith.constant 0 : index
    %c0_1 = arith.constant 0 : index
    %3 = vector.load %arg7[%c0, %c0_1] : memref<16x96xf32, #tpu.memory_space<vmem>>, vector<16x96xf32>
    %c0_2 = arith.constant 0 : index
    %c0_3 = arith.constant 0 : index
    %4 = vector.load %arg3[%c0_2, %c0_3] : memref<16x32xf32, #tpu.memory_space<vmem>>, vector<16x32xf32>
    %c0_4 = arith.constant 0 : index
    %c0_5 = arith.constant 0 : index
    %5 = vector.load %arg4[%c0_4, %c0_5] : memref<32x96xf32, #tpu.memory_space<vmem>>, vector<32x96xf32>
    %cst = arith.constant dense<0.000000e+00> : vector<16x96xf32>
    %6 = tpu.matmul %4, %5, %cst {dimension_numbers = #tpu.dot_dimension_numbers<[1], [0], [0], [1], [0, 0, 1, 1], [], []>} : vector<16x32xf32>, vector<32x96xf32>, vector<16x96xf32> -> vector<16x96xf32>
    %7 = arith.addf %3, %6 : vector<16x96xf32>
    %c0_6 = arith.constant 0 : index
    %c0_7 = arith.constant 0 : index
    %8 = vector.load %arg7[%c0_6, %c0_7] : memref<16x96xf32, #tpu.memory_space<vmem>>, vector<16x96xf32>
    tpu.vector_store %arg7[%c0_6, %c0_7], %7 {strides = array<i32>} : memref<16x96xf32, #tpu.memory_space<vmem>>, vector<16x96xf32>,
    %c0_i32_8 = arith.constant 0 : i32
    %9 = arith.cmpi eq, %arg2, %c0_i32_8 : i32
    %10 = arith.extui %9 : i1 to i32
    %c0_i32_9 = arith.constant 0 : i32
    %11 = arith.cmpi ne, %10, %c0_i32_9 : i32
    scf.if %11 {
      %c0_10 = arith.constant 0 : index
      %c0_11 = arith.constant 0 : index
      %12 = vector.load %arg7[%c0_10, %c0_11] : memref<16x96xf32, #tpu.memory_space<vmem>>, vector<16x96xf32>
      %c0_12 = arith.constant 0 : index
      %c0_13 = arith.constant 0 : index
      %13 = vector.load %arg5[%c0_12, %c0_13] : memref<1x96xf32, #tpu.memory_space<vmem>>, vector<1x96xf32>
      %14 = vector.broadcast %13 : vector<1x96xf32> to vector<16x96xf32>
      %15 = arith.addf %12, %14 : vector<16x96xf32>
      %c0_14 = arith.constant 0 : index
      %c0_15 = arith.constant 0 : index
      %16 = vector.load %arg6[%c0_14, %c0_15] : memref<16x96xf32, #tpu.memory_space<vmem>>, vector<16x96xf32>
      tpu.vector_store %arg6[%c0_14, %c0_15], %15 {strides = array<i32>} : memref<16x96xf32, #tpu.memory_space<vmem>>, vector<16x96xf32>,
    } else {
    }
    return
  }
  func.func @transform_0(%arg0: i32, %arg1: i32, %arg2: i32) -> (i32, i32) {
    %c0_i32 = arith.constant 0 : i32
    return %arg0, %arg2 : i32, i32
  }
  func.func @transform_1(%arg0: i32, %arg1: i32, %arg2: i32) -> (i32, i32) {
    %c0_i32 = arith.constant 0 : i32
    return %arg2, %arg1 : i32, i32
  }
  func.func @transform_2(%arg0: i32, %arg1: i32, %arg2: i32) -> (i32, i32) {
    %c0_i32 = arith.constant 0 : i32
    %c0_i32_0 = arith.constant 0 : i32
    return %c0_i32, %arg1 : i32, i32
  }
  func.func @transform_3(%arg0: i32, %arg1: i32, %arg2: i32) -> (i32, i32) {
    %c0_i32 = arith.constant 0 : i32
    return %arg0, %arg1 : i32, i32
  }
}

</mosaic_0001>

<llo_original>
// kernel: tpu_custom_call.1
$region0: #{tpu_custom_call.1}
  #allocation0 [shape = 'u32[]', space=smem, size = 0x4, offset = 0x4, fixed_abs, tag = 'smem constant byte address 0x4 - core index']
  #allocation1 [shape = 'u32[144,128]{1,0:T(1,128)}', space=vmem, size = 0x12000, scoped, tag = 'internal scratch']
  #allocation2 [shape = 'f32[16,96]{1,0:T(8,128)}', space=vmem, size = 0x2000, scoped, tag = 'scratch operand']
  %s0 = inlined_call_operand.hbm [shape: f32[16,32], index: 0, kind: input, shape index: {}]
  %s1 = inlined_call_operand.hbm [shape: f32[32,96], index: 1, kind: input, shape index: {}]
  %s2 = inlined_call_operand.vmem [shape: f32[1,96], index: 2, kind: input, shape index: {}]
  %s3 = inlined_call_operand.hbm [shape: f32[16,96], index: 3, kind: output, shape index: {}]
  %s4 = sld [smem:[#allocation0]]
  $region38: #{tpu_custom_call.1} parent=0
    _
  %s6 = ssub.s32 1, %s4
  %s7 = scalar_select 0, %s6, %s4
  $region1: #{tpu_custom_call.1} parent=0
    #allocation3 [shape = 'u8[8192]{0}', space=vmem, size = 0x2000, scoped, tag = 'input window, operand 0, single buffered']
    #allocation4 [shape = 's32[1]{0}', space=sflag, size = 0x4, scoped, tag = 'scoped memory for tpu_custom_call.1']
    #allocation5 [shape = 's32[1]{0}', space=sflag, size = 0x4, scoped, tag = 'scoped memory for tpu_custom_call.1']
    #allocation6 [shape = 'u8[16384]{0}', space=vmem, size = 0x4000, scoped, tag = 'input window, operand 1, single buffered']
    #allocation7 [shape = 's32[1]{0}', space=sflag, size = 0x4, scoped, tag = 'scoped memory for tpu_custom_call.1']
    #allocation8 [shape = 'u8[8192]{0}', space=vmem, size = 0x2000, scoped, tag = 'output window, operand 0, single buffered']
    %8 = vsyncpa [#allocation4], 0
    %9 = vsyncpa [#allocation7], 0
    %10 = vsyncpa [#allocation5], 0
    // Predicated region
    $region2: #{tpu_custom_call.1} parent=1 // pred_check
      _
    $region3: #{tpu_custom_call.1} parent=1 // pred_check_branch
      %12 = sbr.rel (0) target = $region5
    $region4: #{tpu_custom_call.1} parent=1 // pred_region
      %s14 = ssub.s32 256, 256
      %15 = vsyncadd [#allocation4], %s14
      %s16 = sshll.u32 [#allocation3], 4
      %s17 = int_to_ptr.vmem [resolvable:$true] %s16
      %22 = dma.hbm_to_vmem [thread:$0]  %s0, 256, %s17, [#allocation4], 128, 128, 8
    $region5: #{tpu_custom_call.1} parent=1 // pred_fallthru
      _
    // Predicated region
    $region6: #{tpu_custom_call.1} parent=1 // pred_check
      _
    $region7: #{tpu_custom_call.1} parent=1 // pred_check_branch
      %24 = sbr.rel (0) target = $region9
    $region8: #{tpu_custom_call.1} parent=1 // pred_region
      %s26 = ssub.s32 512, 512
      %27 = vsyncadd [#allocation7], %s26
      %s28 = sshll.u32 [#allocation6], 4
      %s29 = int_to_ptr.vmem [resolvable:$true] %s28
      %34 = dma.hbm_to_vmem [thread:$0]  %s1, 512, %s29, [#allocation7], 128, 128, 8
    $region9: #{tpu_custom_call.1} parent=1 // pred_fallthru
      _
    // Predicated region
    $region10: #{tpu_custom_call.1} parent=1 // pred_check
      _
    $region11: #{tpu_custom_call.1} parent=1 // pred_check_branch
      %36 = sbr.rel (0) target = $region13
    $region12: #{tpu_custom_call.1} parent=1 // pred_region
      _
    $region13: #{tpu_custom_call.1} parent=1 // pred_fallthru
      _
    // Predicated region
    $region14: #{tpu_custom_call.1} parent=1 // pred_check
      _
    $region15: #{tpu_custom_call.1} parent=1 // pred_check_branch
      %38 = sbr.rel (0) target = $region17
    $region16: #{tpu_custom_call.1} parent=1 // pred_region
      %39 = dma.done [#allocation4], 256
    $region17: #{tpu_custom_call.1} parent=1 // pred_fallthru
      _
    // Predicated region
    $region18: #{tpu_custom_call.1} parent=1 // pred_check
      _
    $region19: #{tpu_custom_call.1} parent=1 // pred_check_branch
      %41 = sbr.rel (0) target = $region21
    $region20: #{tpu_custom_call.1} parent=1 // pred_region
      %42 = dma.done [#allocation7], 512
    $region21: #{tpu_custom_call.1} parent=1 // pred_fallthru
      _
    %p43 = scmp.eq.s32.totalorder 0, 0
    // Predicated region
    $region22: #{tpu_custom_call.1} parent=1 // pred_check
      %p44 = pneg %p43
    $region23: #{tpu_custom_call.1} parent=1 // pred_check_branch
      %46 = sbr.rel (%p44) target = $region25
    $region24: #{tpu_custom_call.1} parent=1 // pred_region
      %vm47 = vcmask 785408
      %48 = vst.msk [vmem:[#allocation2] sm:$0xff] %vm47, 0.0
      %49 = vst.msk [vmem:[#allocation2 + $0x8] sm:$0xff] %vm47, 0.0
    $region25: #{tpu_custom_call.1} parent=1 // pred_fallthru
      _
    %v50 = vld [vmem:[#allocation2] sm:$0xff]
    %v51 = vld [vmem:[#allocation2 + $0x8] sm:$0xff]
    %v52 = vld [vmem:[#allocation3] sm:$0xff]
    %v53 = vld [vmem:[#allocation3 + $0x8] sm:$0xff]
    %v54 = vld [vmem:[#allocation6] sm:$0xff]
    %v55 = vld [vmem:[#allocation6 + $0x8] sm:$0xff]
    %v56 = vld [vmem:[#allocation6 + $0x10] sm:$0xff]
    %v57 = vld [vmem:[#allocation6 + $0x18] sm:$0xff]
    %vm58 = vcmask 261120
    %v60 = vsel %vm58, %v52, 0
    %v63 = vsel %vm58, %v53, 0
    %65 = vmatprep.subr.mxu0 0.0
    %66 = vmatpush1.msra.mxu0 0.0
    %67 = vmatprep.subr.mxu0 0.0
    %68 = vmatpush1.msra.mxu0 0.0
    %69 = vmatprep.subr.mxu0 0.0
    %70 = vmatpush1.msra.mxu0 0.0
    %71 = vmatprep.subr.mxu0 0.0
    %72 = vmatpush1.msra.mxu0 0.0
    %73 = vmatprep.subr.mxu0 0.0
    %74 = vmatpush1.msra.mxu0 0.0
    %75 = vmatprep.subr.mxu0 0.0
    %76 = vmatpush1.msra.mxu0 0.0
    %77 = vmatprep.subr.mxu0 0.0
    %78 = vmatpush1.msra.mxu0 0.0
    %79 = vmatprep.subr.mxu0 0.0
    %80 = vmatpush1.msra.mxu0 0.0
    %81 = vmatprep.subr.mxu0 0.0
    %82 = vmatpush1.msra.mxu0 0.0
    %83 = vmatprep.subr.mxu0 0.0
    %84 = vmatpush1.msra.mxu0 0.0
    %85 = vmatprep.subr.mxu0 0.0
    %86 = vmatpush1.msra.mxu0 0.0
    %87 = vmatprep.subr.mxu0 0.0
    %88 = vmatpush1.msra.mxu0 0.0
    %89 = vmatprep.subr.mxu0 0.0
    %90 = vmatpush1.msra.mxu0 %v57
    %91 = vmatprep.subr.mxu0 0.0
    %92 = vmatpush1.msra.mxu0 %v56
    %93 = vmatprep.subr.mxu0 0.0
    %94 = vmatpush1.msra.mxu0 %v55
    %95 = vmatprep.subr.mxu0 0.0
    %96 = vmatpush1.msra.mxu0 %v54
    %97 = vmatprep.subr.mxu0 0.0
    %98 = vmatpush2.msra.mxu0 0.0
    %99 = vmatprep.subr.mxu0 0.0
    %100 = vmatpush2.msra.mxu0 0.0
    %101 = vmatprep.subr.mxu0 0.0
    %102 = vmatpush2.msra.mxu0 0.0
    %103 = vmatprep.subr.mxu0 0.0
    %104 = vmatpush2.msra.mxu0 0.0
    %105 = vmatprep.subr.mxu0 0.0
    %106 = vmatpush2.msra.mxu0 0.0
    %107 = vmatprep.subr.mxu0 0.0
    %108 = vmatpush2.msra.mxu0 0.0
    %109 = vmatprep.subr.mxu0 0.0
    %110 = vmatpush2.msra.mxu0 0.0
    %111 = vmatprep.subr.mxu0 0.0
    %112 = vmatpush2.msra.mxu0 0.0
    %113 = vmatprep.subr.mxu0 0.0
    %114 = vmatpush2.msra.mxu0 0.0
    %115 = vmatprep.subr.mxu0 0.0
    %116 = vmatpush2.msra.mxu0 0.0
    %117 = vmatprep.subr.mxu0 0.0
    %118 = vmatpush2.msra.mxu0 0.0
    %119 = vmatprep.subr.mxu0 0.0
    %120 = vmatpush2.msra.mxu0 0.0
    %121 = vmatprep.subr.mxu0 0.0
    %122 = vmatpush2.msra.mxu0 0.0
    %123 = vmatprep.subr.mxu0 0.0
    %124 = vmatpush2.msra.mxu0 0.0
    %125 = vmatprep.subr.mxu0 0.0
    %126 = vmatpush2.msra.mxu0 0.0
    %127 = vmatprep.subr.mxu0 0.0
    %128 = vmatpush2.msra.mxu0 0.0
    %129 = vmatprep.mubr.f32.mxu0 0.0
    %130 = vmatmul.mubr.f32.gmra.mxu0 %v60
    %v131 = vpop.f32.mrf.mxu0
    %v132 = vadd.f32 0.0, %v131
    %v133 = vpop.f32.mrf.mxu0
    %134 = vmatprep.mubr.f32.mxu0 0.0
    %135 = vmatmul.mubr.f32.gmra.mxu0 %v63
    %v136 = vpop.f32.mrf.mxu0
    %v137 = vadd.f32 0.0, %v136
    %v138 = vpop.f32.mrf.mxu0
    %139 = vdwg.mxu0
    %v140 = vadd.f32 %v50, %v132
    %v141 = vadd.f32 %v51, %v137
    %vm142 = vcmask 785408
    %143 = vst.msk [vmem:[#allocation2] sm:$0xff] %vm142, %v140
    %144 = vst.msk [vmem:[#allocation2 + $0x8] sm:$0xff] %vm142, %v141
    // Predicated region
    $region26: #{tpu_custom_call.1} parent=1 // pred_check
      %p145 = pneg %p43
    $region27: #{tpu_custom_call.1} parent=1 // pred_check_branch
      %147 = sbr.rel (%p145) target = $region29
    $region28: #{tpu_custom_call.1} parent=1 // pred_region
      %v148 = vld [vmem:[#allocation2] sm:$0xff]
      %v149 = vld [vmem:[#allocation2 + $0x8] sm:$0xff]
      %v150 = vld [vmem:[%s2] sm:$0x1]
      %v152 = vlaneseq
      %v153 = vshrl.u32 %v152, 7
      %v154 = vsub.s32 0, %v153
      %v155 = vrot.slane %v150, %v154
      %v157 = vadd.f32 %v148, %v155
      %v158 = vadd.f32 %v149, %v155
      %159 = vst.msk [vmem:[#allocation8] sm:$0xff] %vm142, %v157
      %160 = vst.msk [vmem:[#allocation8 + $0x8] sm:$0xff] %vm142, %v158
    $region29: #{tpu_custom_call.1} parent=1 // pred_fallthru
      _
    // Predicated region
    $region30: #{tpu_custom_call.1} parent=1 // pred_check
      _
    $region31: #{tpu_custom_call.1} parent=1 // pred_check_branch
      %162 = sbr.rel (0) target = $region33
    $region32: #{tpu_custom_call.1} parent=1 // pred_region
      %s164 = ssub.s32 256, 256
      %165 = vsyncadd [#allocation5], %s164
      %s166 = sshll.u32 [#allocation8], 4
      %s167 = int_to_ptr.vmem [resolvable:$true] %s166
      %172 = dma.vmem_to_hbm [thread:$0]  %s167, 256, %s3, [#allocation5], 128, 128, 8
    $region33: #{tpu_custom_call.1} parent=1 // pred_fallthru
      _
    // Predicated region
    $region34: #{tpu_custom_call.1} parent=1 // pred_check
      _
    $region35: #{tpu_custom_call.1} parent=1 // pred_check_branch
      %174 = sbr.rel (0) target = $region37
    $region36: #{tpu_custom_call.1} parent=1 // pred_region
      %175 = dma.done [#allocation5], 256
    $region37: #{tpu_custom_call.1} parent=1 // pred_fallthru
      _
    %176 = vsyncpa [#allocation4], 1
    %177 = vsyncpa [#allocation7], 1
    %178 = vsyncpa [#allocation5], 1

</llo_original>
